<compile_context>
chip_gen: v6e
topology: v6e:2x2x1
jax: 0.10.0
libtpu: 0.0.40
codegen_flags: <defaults>
</compile_context>

<pallas_src>
import functools
import math

import jax
import jax.numpy as jnp
import numpy as np
from jax.experimental import pallas as pl
from jax.experimental.pallas import tpu as pltpu


def _focal_loss_kernel(x_ref, t_ref, o_ref, acc_ref, *,
                       gamma, eps, total_n, first_pad_tile):
    i = pl.program_id(1)  # inner (reduction / "arbitrary") axis

    @pl.when(i == 0)
    def _():
        acc_ref[...] = jnp.zeros_like(acc_ref)

    x = x_ref[...].astype(jnp.float32)   # (TB, C) logits, upcast in VMEM
    t = t_ref[...]                       # (TB, 1) int32 labels
    tb, c = x.shape

    # target-logit gather: predicated sum instead of one-hot cast + multiply
    cls_ids = jax.lax.broadcasted_iota(jnp.int32, (tb, c), 1)
    x_t = jnp.sum(jnp.where(cls_ids == t, x, 0.0), axis=1, keepdims=True)  # (TB,1)

    # log-softmax of the target class (numerically stable, no full-width probs)
    m = jnp.max(x, axis=1, keepdims=True)                          # (TB, 1)
    denom = jnp.sum(jnp.exp(x - m), axis=1, keepdims=True)         # (TB, 1)
    log_p = x_t - m - jnp.log(denom)                               # (TB, 1)

    # clamp(p_t, eps, 1-eps) is equivalent to clamping log p_t (log monotone)
    log_p = jnp.clip(log_p, math.log(eps), math.log(1.0 - eps))

    # focal weighting, specialized on gamma at trace time
    if gamma == 0.0:
        batch_loss = -log_p
    elif gamma == 2.0:
        w = 1.0 - jnp.exp(log_p)
        batch_loss = -(w * w) * log_p
    else:
        w = 1.0 - jnp.exp(log_p)
        batch_loss = -jnp.power(w, gamma) * log_p

    # accumulate the batch-sum for this split; padded-row masking is gated to
    # only the tiles at/after the batch boundary.
    # NOTE: per-tile sums are reduced first (hierarchical summation), then
    # accumulated across tiles in f32; drift only matters for N in the many
    # millions.
    if first_pad_tile is None:
        acc_ref[...] += jnp.sum(batch_loss, axis=0, keepdims=True)
    else:
        g = pl.program_id(0) * pl.num_programs(1) + i   # global tile index

        @pl.when(g < first_pad_tile)
        def _():
            acc_ref[...] += jnp.sum(batch_loss, axis=0, keepdims=True)

        @pl.when(g >= first_pad_tile)
        def _():
            start = g * tb
            row_ids = start + jax.lax.broadcasted_iota(jnp.int32, (tb, 1), 0)
            masked = jnp.where(row_ids < total_n, batch_loss, 0.0)
            acc_ref[...] += jnp.sum(masked, axis=0, keepdims=True)

    @pl.when(i == pl.num_programs(1) - 1)
    def _():
        o_ref[...] = acc_ref[...].reshape(1, 1, 1)                 # partial sum


def _hw_budget():
    """(vmem_limit_bytes, input_vmem_cap_bytes, num_cores) — generation-aware."""
    vmem_cap = 64 * 1024 * 1024   # conservative fallback (v7x per-TC VMEM)
    num_cores = 2
    try:
        info = pltpu.get_tpu_info()
        cap = getattr(info, "vmem_capacity_bytes", None)
        if cap:
            vmem_cap = int(cap)
        for attr in ("num_cores", "num_tensorcores", "tensorcore_count",
                     "cores_per_chip"):
            v = getattr(info, attr, None)
            if v:
                num_cores = max(1, min(4, int(v)))
                break
    except Exception:
        pass
    # scoped VMEM limit: 3/4 of physical (96 MiB on v5e/v6e, 48 MiB on v7x)
    vmem_limit = min(vmem_cap * 3 // 4, 112 * 1024 * 1024)
    return vmem_limit, num_cores


def focal_loss(logits, targets, *, gamma=0.0, eps=1e-7,
               block_n=8192, num_splits=None):
    """Mean focal loss over the batch (reduce=True, size_average=True)."""
    n, c = logits.shape
    itemsize = logits.dtype.itemsize
    # sublane granularity: 8 rows for 4-byte, 16 for 2-byte, 32 for 1-byte
    min_rows = 8 * max(1, 4 // itemsize)

    vmem_limit, hw_cores = _hw_budget()
    if num_splits is None:
        num_splits = hw_cores

    # VMEM budget per batch row (lane-padded footprints):
    #   logits double-buffered + targets (block_n,1)->lane-padded int32
    #   double-buffered + ~4 full-width f32 in-kernel intermediates.
    c_pad = -(-c // 128) * 128
    per_row_bytes = 2 * c_pad * itemsize + 2 * 128 * 4 + 4 * c_pad * 4
    max_rows = max(min_rows, (vmem_limit // 2) // per_row_bytes)
    max_rows = (max_rows // min_rows) * min_rows
    block_n = max(min_rows, min(block_n, max_rows))
    block_n = min(block_n, -(-n // min_rows) * min_rows)   # don't over-tile tiny N
    block_n = -(-block_n // min_rows) * min_rows           # sublane multiple

    # split the batch across TensorCores; pad the block count up to a multiple
    # of the split count so an odd block count never serializes on one core.
    blocks_needed = -(-n // block_n)
    splits = num_splits if blocks_needed >= num_splits else 1
    blocks = -(-blocks_needed // splits) * splits
    inner_blocks = blocks // splits
    n_pad = blocks * block_n

    x = logits                                    # native dtype — no wrapper cast
    t2d = targets.astype(jnp.int32).reshape(n, 1)
    if n_pad != n:
        x = jnp.pad(x, ((0, n_pad - n), (0, 0)))
        t2d = jnp.pad(t2d, ((0, n_pad - n), (0, 0)))
    first_pad_tile = (n // block_n) if n_pad != n else None

    kernel = functools.partial(
        _focal_loss_kernel,
        gamma=float(gamma), eps=float(eps), total_n=n,
        first_pad_tile=first_pad_tile,
    )
    idx = lambda s, i, nb=inner_blocks: (s * nb + i, 0)

    out = pl.pallas_call(
        kernel,
        out_shape=jax.ShapeDtypeStruct((splits, 1, 1), jnp.float32),
        grid_spec=pltpu.PrefetchScalarGridSpec(
            num_scalar_prefetch=0,
            grid=(splits, inner_blocks),
            in_specs=[
                pl.BlockSpec((block_n, c), idx),
                pl.BlockSpec((block_n, 1), idx),
            ],
            out_specs=pl.BlockSpec((1, 1, 1), lambda s, i: (s, 0, 0)),
            scratch_shapes=[pltpu.VMEM((1, 1), jnp.float32)],
        ),
        compiler_params=pltpu.CompilerParams(
            dimension_semantics=("parallel", "arbitrary"),
            vmem_limit_bytes=int(vmem_limit),
        ),
    )(x, t2d)

    # reduce=True, size_average=True  ->  mean over the batch
    return jnp.sum(out) / jnp.float32(n)


def _focal_loss_ref(logits, targets, gamma=0.0, eps=1e-7):
    # pure-JAX reference mirroring the PyTorch forward
    probs = jax.nn.softmax(logits.astype(jnp.float32), axis=1)
    y = jax.nn.one_hot(targets, logits.shape[1], dtype=jnp.float32)
    p_t = jnp.clip(jnp.sum(probs * y, axis=1), eps, 1.0 - eps)
    batch_loss = -jnp.power(1.0 - p_t, gamma) * jnp.log(p_t)
    return jnp.mean(batch_loss)


if __name__ == "__main__":
    key = jax.random.PRNGKey(0)
    k1, k2, k3, k4 = jax.random.split(key, 4)

    # Case 1: small shapes, specialized gamma paths (0 = module default, 2).
    N, C = 16, 128
    logits = jax.random.normal(k1, (N, C), dtype=jnp.float32)
    targets = jax.random.randint(k2, (N,), 0, C, dtype=jnp.int32)
    for gamma in (0.0, 2.0):
        out = jax.block_until_ready(focal_loss(logits, targets, gamma=gamma))
        ref = _focal_loss_ref(logits, targets, gamma=gamma)
        np.testing.assert_allclose(np.asarray(out), np.asarray(ref),
                                   rtol=1e-5, atol=1e-5)

    # Case 2: multi-tile grid, 2-way core split with padded block count,
    # batch padding + pl.when-gated masking, and a general gamma exercising
    # the jnp.power fallback.
    N2, C2 = 500, 128
    logits2 = jax.random.normal(k3, (N2, C2), dtype=jnp.float32)
    targets2 = jax.random.randint(k4, (N2,), 0, C2, dtype=jnp.int32)
    out2 = jax.block_until_ready(
        focal_loss(logits2, targets2, gamma=0.5, block_n=64))
    ref2 = _focal_loss_ref(logits2, targets2, gamma=0.5)
    np.testing.assert_allclose(np.asarray(out2), np.asarray(ref2),
                               rtol=1e-5, atol=1e-5)

    # Case 3: native bf16 input (no wrapper-side f32 cast; kernel upcasts on
    # the VMEM tile, so HBM read traffic is halved).
    logits_bf16 = logits.astype(jnp.bfloat16)
    out3 = jax.block_until_ready(focal_loss(logits_bf16, targets, gamma=2.0))
    ref3 = _focal_loss_ref(logits_bf16.astype(jnp.float32), targets, gamma=2.0)
    np.testing.assert_allclose(np.asarray(out3), np.asarray(ref3),
                               rtol=1e-5, atol=1e-5)

    # Case 4: default (large) block tiles with an un-split single block and a
    # partially padded tile, exercising the default fast path end to end.
    out4 = jax.block_until_ready(focal_loss(logits2, targets2, gamma=0.0))
    ref4 = _focal_loss_ref(logits2, targets2, gamma=0.0)
    np.testing.assert_allclose(np.asarray(out4), np.asarray(ref4),
                               rtol=1e-5, atol=1e-5)

    print("KERNEL_OK")
</pallas_src>

<mosaic_0001>
module attributes {stable_mosaic.version = 11 : i64} {
  func.func @_focal_loss_kernel(%arg0: i32, %arg1: i32, %arg2: memref<16x128xf32, #tpu.memory_space<vmem>>, %arg3: memref<16x1xi32, #tpu.memory_space<vmem>>, %arg4: memref<1x1x1xf32, #tpu.memory_space<vmem>>, %arg5: memref<1x1xf32, #tpu.memory_space<vmem>>) attributes {dimension_semantics = [#tpu.dimension_semantics<parallel>, #tpu.dimension_semantics<arbitrary>], iteration_bounds = array<i64: 1, 1>, scalar_prefetch = 0 : i64, scratch_operands = 1 : i64, tpu.core_type = #tpu.core_type<tc>, window_params = [{transform_indices = @transform_0, window_bounds = array<i64: 16, 128>}, {transform_indices = @transform_1, window_bounds = array<i64: 16, 1>}, {transform_indices = @transform_2, window_bounds = array<i64: 1, 1, 1>}]} {
    %c0_i32 = arith.constant 0 : i32
    %0 = arith.cmpi eq, %arg1, %c0_i32 : i32
    %1 = arith.extui %0 : i1 to i32
    %c0_i32_0 = arith.constant 0 : i32
    %2 = arith.cmpi ne, %1, %c0_i32_0 : i32
    scf.if %2 {
      %cst_17 = arith.constant 0.000000e+00 : f32
      %36 = vector.broadcast %cst_17 : f32 to vector<1x1xf32>
      %c0_18 = arith.constant 0 : index
      %c0_19 = arith.constant 0 : index
      %37 = vector.load %arg5[%c0_18, %c0_19] : memref<1x1xf32, #tpu.memory_space<vmem>>, vector<1x1xf32>
      tpu.vector_store %arg5[%c0_18, %c0_19], %36 {strides = array<i32>} : memref<1x1xf32, #tpu.memory_space<vmem>>, vector<1x1xf32>,
    } else {
    }
    %c0 = arith.constant 0 : index
    %c0_1 = arith.constant 0 : index
    %3 = vector.load %arg2[%c0, %c0_1] : memref<16x128xf32, #tpu.memory_space<vmem>>, vector<16x128xf32>
    %c0_2 = arith.constant 0 : index
    %c0_3 = arith.constant 0 : index
    %4 = vector.load %arg3[%c0_2, %c0_3] : memref<16x1xi32, #tpu.memory_space<vmem>>, vector<16x1xi32>
    %5 = tpu.iota {dimensions = array<i32: 1>} : vector<16x128xi32>
    %6 = vector.broadcast %4 : vector<16x1xi32> to vector<16x128xi32>
    %7 = arith.cmpi eq, %5, %6 : vector<16x128xi32>
    %cst = arith.constant 0.000000e+00 : f32
    %8 = vector.broadcast %cst : f32 to vector<16x128xf32>
    %9 = arith.select %7, %3, %8 : vector<16x128xi1>, vector<16x128xf32>
    %cst_4 = arith.constant dense<0.000000e+00> : vector<16xf32>
    %10 = vector.multi_reduction <add>, %9, %cst_4 [1] : vector<16x128xf32> to vector<16xf32>
    %11 = vector.shape_cast %10 : vector<16xf32> to vector<16x1xf32>
    %cst_5 = arith.constant dense<0xFF800000> : vector<16xf32>
    %12 = vector.multi_reduction <maximumf>, %3, %cst_5 [1] : vector<16x128xf32> to vector<16xf32>
    %13 = vector.shape_cast %12 : vector<16xf32> to vector<16x1xf32>
    %14 = vector.broadcast %13 : vector<16x1xf32> to vector<16x128xf32>
    %15 = arith.subf %3, %14 : vector<16x128xf32>
    %16 = math.exp %15 : vector<16x128xf32>
    %cst_6 = arith.constant dense<0.000000e+00> : vector<16xf32>
    %17 = vector.multi_reduction <add>, %16, %cst_6 [1] : vector<16x128xf32> to vector<16xf32>
    %18 = vector.shape_cast %17 : vector<16xf32> to vector<16x1xf32>
    %19 = arith.subf %11, %13 : vector<16x1xf32>
    %20 = math.log %18 : vector<16x1xf32>
    %21 = arith.subf %19, %20 : vector<16x1xf32>
    %cst_7 = arith.constant -16.1180954 : f32
    %cst_8 = arith.constant -1.00000008E-7 : f32
    %22 = vector.broadcast %cst_7 : f32 to vector<16x1xf32>
    %23 = arith.maximumf %22, %21 : vector<16x1xf32>
    %24 = vector.broadcast %cst_8 : f32 to vector<16x1xf32>
    %25 = arith.minimumf %24, %23 : vector<16x1xf32>
    %cst_9 = arith.constant 0.000000e+00 : f32
    %26 = vector.broadcast %cst_9 : f32 to vector<16x1xf32>
    %27 = arith.subf %26, %25 : vector<16x1xf32>
    %c0_10 = arith.constant 0 : index
    %c0_11 = arith.constant 0 : index
    %28 = vector.load %arg5[%c0_10, %c0_11] : memref<1x1xf32, #tpu.memory_space<vmem>>, vector<1x1xf32>
    %cst_12 = arith.constant dense<0.000000e+00> : vector<1xf32>
    %29 = vector.multi_reduction <add>, %27, %cst_12 [0] : vector<16x1xf32> to vector<1xf32>
    %30 = vector.shape_cast %29 : vector<1xf32> to vector<1x1xf32>
    %31 = arith.addf %28, %30 : vector<1x1xf32>
    %c0_13 = arith.constant 0 : index
    %c0_14 = arith.constant 0 : index
    %32 = vector.load %arg5[%c0_13, %c0_14] : memref<1x1xf32, #tpu.memory_space<vmem>>, vector<1x1xf32>
    tpu.vector_store %arg5[%c0_13, %c0_14], %31 {strides = array<i32>} : memref<1x1xf32, #tpu.memory_space<vmem>>, vector<1x1xf32>,
    %c0_i32_15 = arith.constant 0 : i32
    %33 = arith.cmpi eq, %arg1, %c0_i32_15 : i32
    %34 = arith.extui %33 : i1 to i32
    %c0_i32_16 = arith.constant 0 : i32
    %35 = arith.cmpi ne, %34, %c0_i32_16 : i32
    scf.if %35 {
      %c0_17 = arith.constant 0 : index
      %c0_18 = arith.constant 0 : index
      %36 = vector.load %arg5[%c0_17, %c0_18] : memref<1x1xf32, #tpu.memory_space<vmem>>, vector<1x1xf32>
      %37 = vector.shape_cast %36 : vector<1x1xf32> to vector<1x1x1xf32>
      %c0_19 = arith.constant 0 : index
      %c0_20 = arith.constant 0 : index
      %c0_21 = arith.constant 0 : index
      %38 = vector.load %arg4[%c0_19, %c0_20, %c0_21] : memref<1x1x1xf32, #tpu.memory_space<vmem>>, vector<1x1x1xf32>
      tpu.vector_store %arg4[%c0_19, %c0_20, %c0_21], %37 {strides = array<i32>} : memref<1x1x1xf32, #tpu.memory_space<vmem>>, vector<1x1x1xf32>,
    } else {
    }
    return
  }
  func.func @transform_0(%arg0: i32, %arg1: i32) -> (i32, i32) {
    %c1_i32 = arith.constant 1 : i32
    %0 = arith.muli %arg0, %c1_i32 : i32
    %1 = arith.addi %0, %arg1 : i32
    %c0_i32 = arith.constant 0 : i32
    %c0_i32_0 = arith.constant 0 : i32
    return %1, %c0_i32 : i32, i32
  }
  func.func @transform_1(%arg0: i32, %arg1: i32) -> (i32, i32) {
    %c1_i32 = arith.constant 1 : i32
    %0 = arith.muli %arg0, %c1_i32 : i32
    %1 = arith.addi %0, %arg1 : i32
    %c0_i32 = arith.constant 0 : i32
    %c0_i32_0 = arith.constant 0 : i32
    return %1, %c0_i32 : i32, i32
  }
  func.func @transform_2(%arg0: i32, %arg1: i32) -> (i32, i32, i32) {
    %c0_i32 = arith.constant 0 : i32
    %c0_i32_0 = arith.constant 0 : i32
    %c0_i32_1 = arith.constant 0 : i32
    return %arg0, %c0_i32, %c0_i32_0 : i32, i32, i32
  }
}

</mosaic_0001>

<llo_original>
// kernel: tpu_custom_call.1
$region0: #{tpu_custom_call.1}
  #allocation0 [shape = 'u32[]', space=smem, size = 0x4, offset = 0x4, fixed_abs, tag = 'smem constant byte address 0x4 - core index']
  #allocation1 [shape = 'u32[144,128]{1,0:T(1,128)}', space=vmem, size = 0x12000, scoped, tag = 'internal scratch']
  #allocation2 [shape = 'f32[1,1]{1,0:T(1,128)}', space=vmem, size = 0x200, scoped, tag = 'scratch operand']
  %s0 = inlined_call_operand.vmem [shape: f32[16,128], index: 0, kind: input, shape index: {}]
  %s1 = inlined_call_operand.vmem [shape: s32[16,1], index: 1, kind: input, shape index: {}]
  %s2 = inlined_call_operand.hbm [shape: f32[1,1,1], index: 2, kind: output, shape index: {}]
  %s3 = sld [smem:[#allocation0]]
  $region26: #{tpu_custom_call.1} parent=0
    _
  %s5 = ssub.s32 1, %s3
  %s6 = scalar_select 0, %s5, %s3
  $region1: #{tpu_custom_call.1} parent=0
    #allocation3 [shape = 'u8[512]{0}', space=vmem, size = 0x400, scoped, tag = 'output window, operand 0, single buffered']
    #allocation4 [shape = 's32[1]{0}', space=sflag, size = 0x4, scoped, tag = 'scoped memory for tpu_custom_call.1']
    %7 = vsyncpa [#allocation4], 0
    // Predicated region
    $region2: #{tpu_custom_call.1} parent=1 // pred_check
      _
    $region3: #{tpu_custom_call.1} parent=1 // pred_check_branch
      %9 = sbr.rel (0) target = $region5
    $region4: #{tpu_custom_call.1} parent=1 // pred_region
      %s10 = sadd.s32 0, 0
      %s11 = smul.u32 2, %s10
      %p12 = scmp.lt.s32.totalorder %s11, 1
      %s13 = scalar_select %p12, %s11, 1
      %s14 = smul.addr %s13, 8
      %s15 = scalar_lea.vmem %s0, %s14
      %s16 = sadd.s32 0, 0
      %s17 = smul.u32 2, %s16
    $region5: #{tpu_custom_call.1} parent=1 // pred_fallthru
      _
    // Predicated region
    $region6: #{tpu_custom_call.1} parent=1 // pred_check
      _
    $region7: #{tpu_custom_call.1} parent=1 // pred_check_branch
      %19 = sbr.rel (0) target = $region9
    $region8: #{tpu_custom_call.1} parent=1 // pred_region
      %s20 = sadd.s32 0, 0
      %s21 = smul.u32 2, %s20
      %p22 = scmp.lt.s32.totalorder %s21, 1
      %s23 = scalar_select %p22, %s21, 1
      %s24 = smul.addr %s23, 8
      %s25 = scalar_lea.vmem %s1, %s24
      %s26 = sadd.s32 0, 0
      %s27 = smul.u32 2, %s26
    $region9: #{tpu_custom_call.1} parent=1 // pred_fallthru
      _
    %s28 = sadd.s32 0, 0
    %s29 = smul.u32 2, %s28
    %p30 = scmp.lt.s32.totalorder %s29, 1
    %s31 = scalar_select %p30, %s29, 1
    %s32 = smul.addr %s31, 8
    %s33 = scalar_lea.vmem %s0, %s32
    %s34 = sadd.s32 0, 0
    %s35 = smul.u32 2, %s34
    %p36 = scmp.lt.s32.totalorder %s35, 1
    %s37 = scalar_select %p36, %s35, 1
    %s38 = smul.addr %s37, 8
    %s39 = scalar_lea.vmem %s1, %s38
    %s40 = sadd.s32 0, 0
    %s41 = smul.u32 2, %s40
    %p42 = scmp.lt.s32.totalorder %s41, 1
    %s43 = scalar_select %p42, %s41, 1
    %s44 = smul.addr %s43, 8
    %s45 = scalar_lea.vmem %s0, %s44
    %s46 = sadd.s32 0, 0
    %s47 = smul.u32 2, %s46
    %s48 = sadd.s32 0, 0
    %s49 = smul.u32 2, %s48
    %p50 = scmp.lt.s32.totalorder %s49, 1
    %s51 = scalar_select %p50, %s49, 1
    %s52 = smul.addr %s51, 8
    %s53 = scalar_lea.vmem %s1, %s52
    %s54 = sadd.s32 0, 0
    %s55 = smul.u32 2, %s54
    %p56 = scmp.eq.s32.totalorder 0, 0
    // Predicated region
    $region10: #{tpu_custom_call.1} parent=1 // pred_check
      %p57 = pneg %p56
    $region11: #{tpu_custom_call.1} parent=1 // pred_check_branch
      %59 = sbr.rel (%p57) target = $region13
    $region12: #{tpu_custom_call.1} parent=1 // pred_region
      %vm60 = vcmask 0
      %61 = vst.msk [vmem:[#allocation2] sm:$0x1] %vm60, 0.0
    $region13: #{tpu_custom_call.1} parent=1 // pred_fallthru
      _
    %v62 = vld [vmem:[%s45] sm:$0xff]
    %v63 = vld [vmem:[%s45 + $0x8] sm:$0xff]
    %v64 = vld [vmem:[%s53] sm:$0xff]
    %v65 = vld [vmem:[%s53 + $0x8] sm:$0xff]
    %v66 = vlaneseq
    %v67 = vand.u32 %v66, 127
    %68 = vset.pattern.permute.xlu0 0
    %69 = vperm.xlu0 %68, %v64
    %v70 = vpop.permute.xlu0 %69
    %71 = vset.pattern.permute.xlu0 0
    %72 = vperm.xlu0 %71, %v65
    %v73 = vpop.permute.xlu0 %72
    %vm74 = vcmp.eq.s32.totalorder %v67, %v70
    %vm75 = vcmp.eq.s32.totalorder %v67, %v73
    %v76 = vsel %vm74, %v62, 0.0
    %v77 = vsel %vm75, %v63, 0.0
    %78 = vadd.xlane.f32.xlu0 %v76
    %v79 = vpop.xlane.xlu0 %78
    %80 = vadd.xlane.f32.xlu0 %v77
    %v81 = vpop.xlane.xlu0 %80
    %82 = vmax.xlane.f32.xlu0 %v62
    %v83 = vpop.xlane.xlu0 %82
    %84 = vmax.xlane.f32.xlu0 %v63
    %v85 = vpop.xlane.xlu0 %84
    %v86 = vsub.f32 %v62, %v83
    %v87 = vsub.f32 %v63, %v85
    %v88 = vmul.f32 %v86, 1.442695
    %v89 = vpow.pop %v88
    %v90 = vmul.f32 %v87, 1.442695
    %v91 = vpow.pop %v90
    %92 = vadd.xlane.f32.xlu0 %v89
    %v93 = vpop.xlane.xlu0 %92
    %94 = vadd.xlane.f32.xlu0 %v91
    %v95 = vpop.xlane.xlu0 %94
    %v96 = vsub.f32 %v79, %v83
    %v97 = vsub.f32 %v81, %v85
    %v98 = vlog2.pop %v93
    %v99 = vmul.f32 %v98, 0.6931472
    %v100 = vlog2.pop %v95
    %v101 = vmul.f32 %v100, 0.6931472
    %v102 = vsub.f32 %v96, %v99
    %v103 = vsub.f32 %v97, %v101
    %v104 = vmax.f32 %v102, -16.118095
    %v105 = vmax.f32 %v103, -16.118095
    %v106 = vmin.f32 %v104, -1.0000001e-07
    %v107 = vmin.f32 %v105, -1.0000001e-07
    %v108 = vsub.f32 0.0, %v106
    %v109 = vsub.f32 0.0, %v107
    %v110 = vld [vmem:[#allocation2] sm:$0x1]
    %v111 = vadd.f32 %v108, %v109
    %v112 = vrot.slane %v111, 4
    %v113 = vadd.f32 %v111, %v112
    %v114 = vrot.slane %v113, 2
    %v115 = vadd.f32 %v113, %v114
    %v116 = vrot.slane %v115, 1
    %v117 = vadd.f32 %v115, %v116
    %v118 = vadd.f32 %v110, %v117
    %vm119 = vcmask 0
    %120 = vst.msk [vmem:[#allocation2] sm:$0x1] %vm119, %v118
    // Predicated region
    $region14: #{tpu_custom_call.1} parent=1 // pred_check
      %p121 = pneg %p56
    $region15: #{tpu_custom_call.1} parent=1 // pred_check_branch
      %123 = sbr.rel (%p121) target = $region17
    $region16: #{tpu_custom_call.1} parent=1 // pred_region
      %v124 = vld [vmem:[#allocation2] sm:$0x1]
      %125 = vst.msk [vmem:[#allocation3] sm:$0x1] %vm119, %v124
    $region17: #{tpu_custom_call.1} parent=1 // pred_fallthru
      _
    // Predicated region
    $region18: #{tpu_custom_call.1} parent=1 // pred_check
      _
    $region19: #{tpu_custom_call.1} parent=1 // pred_check_branch
      %127 = sbr.rel (0) target = $region21
    $region20: #{tpu_custom_call.1} parent=1 // pred_region
      %s129 = ssub.s32 16, 16
      %130 = vsyncadd [#allocation4], %s129
      %s132 = sshll.u32 [#allocation3], 4
      %s133 = int_to_ptr.vmem [resolvable:$true] %s132
      %135 = dma.vmem_to_hbm [thread:$0]  %s133, 16, %s2, [#allocation4]
    $region21: #{tpu_custom_call.1} parent=1 // pred_fallthru
      _
    // Predicated region
    $region22: #{tpu_custom_call.1} parent=1 // pred_check
      _
    $region23: #{tpu_custom_call.1} parent=1 // pred_check_branch
      %137 = sbr.rel (0) target = $region25
    $region24: #{tpu_custom_call.1} parent=1 // pred_region
      %138 = dma.done [#allocation4], 16
    $region25: #{tpu_custom_call.1} parent=1 // pred_fallthru
      _
    %139 = vsyncpa [#allocation4], 1

</llo_original>
